<compile_context>
chip_gen: v7x
topology: tpu7x:2x2x1
jax: 0.10.0
libtpu: 0.0.40
codegen_flags: <defaults>
</compile_context>

<pallas_src>
import math

import jax
import jax.numpy as jnp
from jax.experimental import pallas as pl
from jax.experimental.pallas import tpu as pltpu


def _token_conv_kernel(xm1_ref, x0_ref, xp1_ref, w_ref, b_ref, o_ref):
    # xm1/x0/xp1: (TS, C) f32; w: (3, C, D) f32; b: (1, D) f32; o: (TS, D) f32
    acc = jnp.dot(xm1_ref[...], w_ref[0], preferred_element_type=jnp.float32)
    acc = acc + jnp.dot(x0_ref[...], w_ref[1], preferred_element_type=jnp.float32)
    acc = acc + jnp.dot(xp1_ref[...], w_ref[2], preferred_element_type=jnp.float32)
    o_ref[...] = (acc + b_ref[...]).astype(o_ref.dtype)


def token_embedding(x, weight, bias, *, block_s=512):
    """Circular Conv1d token embedding (PyTorch TokenEmbedding.forward).

    x:      (B, S, c_in)        float32
    weight: (d_model, c_in, 3)  float32  (PyTorch Conv1d weight layout)
    bias:   (d_model,)          float32
    returns (B, S, d_model)     float32
    """
    B, S, C = x.shape
    D = weight.shape[0]

    # Circular taps (data movement only, no compute in the wrapper).
    x_m1 = jnp.roll(x, 1, axis=1)    # x[(t-1) % S]
    x_p1 = jnp.roll(x, -1, axis=1)   # x[(t+1) % S]
    w_k = jnp.transpose(weight, (2, 1, 0))   # (3, C, D); w_k[k, i, o] = weight[o, i, k]
    b2d = bias.reshape(1, D)

    # Seq tile: either the full S (always legal) or a multiple-of-8 tile for long sequences.
    ts = S if S <= block_s else block_s
    grid = (B, pl.cdiv(S, ts))

    x_spec = pl.BlockSpec((None, ts, C), lambda b, i: (b, i, 0))
    out = pl.pallas_call(
        _token_conv_kernel,
        out_shape=jax.ShapeDtypeStruct((B, S, D), jnp.float32),
        grid=grid,
        in_specs=[
            x_spec,  # x[(t-1)%S]
            x_spec,  # x[t]
            x_spec,  # x[(t+1)%S]
            pl.BlockSpec((3, C, D), lambda b, i: (0, 0, 0)),
            pl.BlockSpec((1, D), lambda b, i: (0, 0)),
        ],
        out_specs=pl.BlockSpec((None, ts, D), lambda b, i: (b, i, 0)),
        compiler_params=pltpu.CompilerParams(
            dimension_semantics=("parallel", "parallel")),
    )(x_m1, x, x_p1, w_k, b2d)
    return out


def _reference_conv1d_circular(x, weight, bias):
    """Pure-XLA reference: circular pad + valid cross-correlation (PyTorch semantics)."""
    xc = jnp.transpose(x, (0, 2, 1))                                   # (B, C, S)
    xp = jnp.concatenate([xc[:, :, -1:], xc, xc[:, :, :1]], axis=-1)   # circular pad 1
    out = jax.lax.conv_general_dilated(
        xp, weight, window_strides=(1,), padding="VALID",
        dimension_numbers=("NCH", "OIH", "NCH"),
        precision=jax.lax.Precision.HIGHEST)                           # (B, D, S)
    out = out + bias[None, :, None]
    return jnp.transpose(out, (0, 2, 1))                               # (B, S, D)


if __name__ == "__main__":
    B, S, C, D = 2, 16, 7, 128   # small shapes; D multiple of 128 keeps stores lane-dense

    key = jax.random.PRNGKey(0)
    kx, kw, kb = jax.random.split(key, 3)
    x = jax.random.normal(kx, (B, S, C), dtype=jnp.float32)

    # Mimic the module init: kaiming_normal_(fan_in, leaky_relu) + default Conv1d bias init.
    fan_in = C * 3
    w_std = math.sqrt(2.0 / fan_in)
    weight = w_std * jax.random.normal(kw, (D, C, 3), dtype=jnp.float32)
    bound = 1.0 / math.sqrt(fan_in)
    bias = jax.random.uniform(kb, (D,), jnp.float32, -bound, bound)

    out = token_embedding(x, weight, bias)
    out = jax.block_until_ready(out)

    ref = _reference_conv1d_circular(x, weight, bias)
    assert out.shape == (B, S, D)
    assert jnp.allclose(out, ref, atol=1e-3, rtol=1e-3), \
        f"max abs err {float(jnp.max(jnp.abs(out - ref)))}"

    print("KERNEL_OK")
</pallas_src>

<mosaic_0001>
module attributes {stable_mosaic.version = 11 : i64} {
  func.func @_token_conv_kernel(%arg0: i32, %arg1: i32, %arg2: memref<1x16x7xf32, #tpu.memory_space<vmem>>, %arg3: memref<1x16x7xf32, #tpu.memory_space<vmem>>, %arg4: memref<1x16x7xf32, #tpu.memory_space<vmem>>, %arg5: memref<3x7x128xf32, #tpu.memory_space<vmem>>, %arg6: memref<1x128xf32, #tpu.memory_space<vmem>>, %arg7: memref<1x16x128xf32, #tpu.memory_space<vmem>>) attributes {dimension_semantics = [#tpu.dimension_semantics<parallel>, #tpu.dimension_semantics<parallel>], iteration_bounds = array<i64: 2, 1>, scalar_prefetch = 0 : i64, scratch_operands = 0 : i64, tpu.core_type = #tpu.core_type<tc>, window_params = [{transform_indices = @transform_0, window_bounds = array<i64: 1, 16, 7>}, {transform_indices = @transform_1, window_bounds = array<i64: 1, 16, 7>}, {transform_indices = @transform_2, window_bounds = array<i64: 1, 16, 7>}, {pipeline_mode = #tpu.pipeline_mode<synchronous>, transform_indices = @transform_3, window_bounds = array<i64: 3, 7, 128>}, {pipeline_mode = #tpu.pipeline_mode<synchronous>, transform_indices = @transform_4, window_bounds = array<i64: 1, 128>}, {transform_indices = @transform_5, window_bounds = array<i64: 1, 16, 128>}]} {
    %c0 = arith.constant 0 : index
    %c0_0 = arith.constant 0 : index
    %c0_1 = arith.constant 0 : index
    %0 = vector.load %arg2[%c0, %c0_0, %c0_1] : memref<1x16x7xf32, #tpu.memory_space<vmem>>, vector<1x16x7xf32>
    %1 = vector.shape_cast %0 : vector<1x16x7xf32> to vector<16x7xf32>
    %c0_2 = arith.constant 0 : index
    %c0_3 = arith.constant 0 : index
    %c0_4 = arith.constant 0 : index
    %2 = vector.load %arg5[%c0_2, %c0_3, %c0_4] : memref<3x7x128xf32, #tpu.memory_space<vmem>>, vector<1x7x128xf32>
    %3 = vector.shape_cast %2 : vector<1x7x128xf32> to vector<7x128xf32>
    %cst = arith.constant dense<0.000000e+00> : vector<16x128xf32>
    %4 = tpu.matmul %1, %3, %cst {dimension_numbers = #tpu.dot_dimension_numbers<[1], [0], [0], [1], [0, 0, 1, 1], [], []>} : vector<16x7xf32>, vector<7x128xf32>, vector<16x128xf32> -> vector<16x128xf32>
    %c0_5 = arith.constant 0 : index
    %c0_6 = arith.constant 0 : index
    %c0_7 = arith.constant 0 : index
    %5 = vector.load %arg3[%c0_5, %c0_6, %c0_7] : memref<1x16x7xf32, #tpu.memory_space<vmem>>, vector<1x16x7xf32>
    %6 = vector.shape_cast %5 : vector<1x16x7xf32> to vector<16x7xf32>
    %c1 = arith.constant 1 : index
    %c0_8 = arith.constant 0 : index
    %c0_9 = arith.constant 0 : index
    %7 = vector.load %arg5[%c1, %c0_8, %c0_9] : memref<3x7x128xf32, #tpu.memory_space<vmem>>, vector<1x7x128xf32>
    %8 = vector.shape_cast %7 : vector<1x7x128xf32> to vector<7x128xf32>
    %cst_10 = arith.constant dense<0.000000e+00> : vector<16x128xf32>
    %9 = tpu.matmul %6, %8, %cst_10 {dimension_numbers = #tpu.dot_dimension_numbers<[1], [0], [0], [1], [0, 0, 1, 1], [], []>} : vector<16x7xf32>, vector<7x128xf32>, vector<16x128xf32> -> vector<16x128xf32>
    %10 = arith.addf %4, %9 : vector<16x128xf32>
    %c0_11 = arith.constant 0 : index
    %c0_12 = arith.constant 0 : index
    %c0_13 = arith.constant 0 : index
    %11 = vector.load %arg4[%c0_11, %c0_12, %c0_13] : memref<1x16x7xf32, #tpu.memory_space<vmem>>, vector<1x16x7xf32>
    %12 = vector.shape_cast %11 : vector<1x16x7xf32> to vector<16x7xf32>
    %c2 = arith.constant 2 : index
    %c0_14 = arith.constant 0 : index
    %c0_15 = arith.constant 0 : index
    %13 = vector.load %arg5[%c2, %c0_14, %c0_15] : memref<3x7x128xf32, #tpu.memory_space<vmem>>, vector<1x7x128xf32>
    %14 = vector.shape_cast %13 : vector<1x7x128xf32> to vector<7x128xf32>
    %cst_16 = arith.constant dense<0.000000e+00> : vector<16x128xf32>
    %15 = tpu.matmul %12, %14, %cst_16 {dimension_numbers = #tpu.dot_dimension_numbers<[1], [0], [0], [1], [0, 0, 1, 1], [], []>} : vector<16x7xf32>, vector<7x128xf32>, vector<16x128xf32> -> vector<16x128xf32>
    %16 = arith.addf %10, %15 : vector<16x128xf32>
    %c0_17 = arith.constant 0 : index
    %c0_18 = arith.constant 0 : index
    %17 = vector.load %arg6[%c0_17, %c0_18] : memref<1x128xf32, #tpu.memory_space<vmem>>, vector<1x128xf32>
    %18 = vector.broadcast %17 : vector<1x128xf32> to vector<16x128xf32>
    %19 = arith.addf %16, %18 : vector<16x128xf32>
    %c0_19 = arith.constant 0 : index
    %c0_20 = arith.constant 0 : index
    %c0_21 = arith.constant 0 : index
    %20 = vector.load %arg7[%c0_19, %c0_20, %c0_21] : memref<1x16x128xf32, #tpu.memory_space<vmem>>, vector<1x16x128xf32>
    %21 = vector.shape_cast %20 : vector<1x16x128xf32> to vector<16x128xf32>
    %22 = vector.shape_cast %19 : vector<16x128xf32> to vector<1x16x128xf32>
    tpu.vector_store %arg7[%c0_19, %c0_20, %c0_21], %22 {strides = array<i32>} : memref<1x16x128xf32, #tpu.memory_space<vmem>>, vector<1x16x128xf32>,
    return
  }
  func.func @transform_0(%arg0: i32, %arg1: i32) -> (i32, i32, i32) {
    %c0_i32 = arith.constant 0 : i32
    %c0_i32_0 = arith.constant 0 : i32
    return %arg0, %arg1, %c0_i32 : i32, i32, i32
  }
  func.func @transform_1(%arg0: i32, %arg1: i32) -> (i32, i32, i32) {
    %c0_i32 = arith.constant 0 : i32
    %c0_i32_0 = arith.constant 0 : i32
    return %arg0, %arg1, %c0_i32 : i32, i32, i32
  }
  func.func @transform_2(%arg0: i32, %arg1: i32) -> (i32, i32, i32) {
    %c0_i32 = arith.constant 0 : i32
    %c0_i32_0 = arith.constant 0 : i32
    return %arg0, %arg1, %c0_i32 : i32, i32, i32
  }
  func.func @transform_3(%arg0: i32, %arg1: i32) -> (i32, i32, i32) {
    %c0_i32 = arith.constant 0 : i32
    %c0_i32_0 = arith.constant 0 : i32
    %c0_i32_1 = arith.constant 0 : i32
    %c0_i32_2 = arith.constant 0 : i32
    return %c0_i32, %c0_i32_0, %c0_i32_1 : i32, i32, i32
  }
  func.func @transform_4(%arg0: i32, %arg1: i32) -> (i32, i32) {
    %c0_i32 = arith.constant 0 : i32
    %c0_i32_0 = arith.constant 0 : i32
    %c0_i32_1 = arith.constant 0 : i32
    return %c0_i32, %c0_i32_0 : i32, i32
  }
  func.func @transform_5(%arg0: i32, %arg1: i32) -> (i32, i32, i32) {
    %c0_i32 = arith.constant 0 : i32
    %c0_i32_0 = arith.constant 0 : i32
    return %arg0, %arg1, %c0_i32 : i32, i32, i32
  }
}

</mosaic_0001>

<llo_original>
// kernel: tpu_custom_call.1
$region0: #{tpu_custom_call.1}
  #allocation0 [shape = 'u32[]', space=smem, size = 0x4, offset = 0x4, fixed_abs, tag = 'smem constant byte address 0x4 - core index']
  #allocation1 [shape = 'u32[144,128]{1,0:T(1,128)}', space=vmem, size = 0x12000, scoped, tag = 'internal scratch']
  %s0 = inlined_call_operand.vmem [shape: f32[2,16,7], index: 0, kind: input, shape index: {}]
  %s1 = inlined_call_operand.vmem [shape: f32[2,16,7], index: 1, kind: input, shape index: {}]
  %s2 = inlined_call_operand.vmem [shape: f32[2,16,7], index: 2, kind: input, shape index: {}]
  %s3 = inlined_call_operand.vmem [shape: f32[3,7,128], index: 3, kind: input, shape index: {}]
  %s4 = inlined_call_operand.vmem [shape: f32[1,128], index: 4, kind: input, shape index: {}]
  %s5 = inlined_call_operand.hbm [shape: f32[2,16,128], index: 5, kind: output, shape index: {}]
  %s6 = sld [smem:[#allocation0]]
  $region53: #{tpu_custom_call.1} parent=0
    _
  %s8 = ssub.s32 1, %s6
  %s9 = scalar_select 0, %s8, %s6
  $region1: #{tpu_custom_call.1} parent=0
    #allocation2 [shape = 'u8[16384]{0}', space=vmem, size = 0x4000, scoped, tag = 'output window, operand 0']
    #allocation3 [shape = 's32[2]{0}', space=sflag, size = 0x8, scoped, tag = 'scoped memory for tpu_custom_call.1']
    %10 = vsyncpa [#allocation3], 0
    %s11 = scalar_lea.sflag [#allocation3], 1
    %12 = vsyncpa %s11, 0
    loop: start=0, step=1, limit=4
    $region2: #{tpu_custom_call.1} parent=1 // loop_pre_header
      _
    $region3: #{tpu_custom_call.1} parent=1 // loop_header
      %s14 = sphi 0, %s18
      %p15 = scmp.ge.s32.totalorder %s14, 4
      %s21 = sphi 0, %s33
      %s22 = sphi 0, %s29
      %s23 = sphi 0, %s21
      %s24 = sphi 0, %s22
      %s25 = sphi 0, %s23
      %s26 = sphi 0, %s24
      %s38 = sphi 0, %s40
      %s41 = sphi 0, %s38
      %s42 = sphi 0, %s41
      %s58 = sphi 0, %s42
      %s66 = sphi 0, %s68
      %s69 = sphi 0, %s66
      %s70 = sphi 0, %s69
      %s86 = sphi 0, %s70
      %s94 = sphi 0, %s96
      %s97 = sphi 0, %s94
      %s98 = sphi 0, %s97
      %s114 = sphi 0, %s98
      %s118 = sphi 0, %s118
      %s120 = sphi 0, %s118
      %s121 = sphi 0, %s120
      %s135 = sphi 0, %s121
      %s139 = sphi 0, %s139
      %s141 = sphi 0, %s139
      %s142 = sphi 0, %s141
      %s156 = sphi 0, %s142
      %s164 = sphi 0, %s166
      %s167 = sphi 0, %s164
      %s168 = sphi 0, %s167
      %s184 = sphi 0, %s168
    $region4: #{tpu_custom_call.1} parent=1 // loop_header_branch
      %17 = sbr.rel (%p15) target = $region8
    $region5: #{tpu_custom_call.1} parent=1 // loop_body
      %s19 = ssub.s32 %s14, 1
      %s20 = ssub.s32 %s14, 2
      %s27 = sadd.s32 1, %s22
      %p28 = scmp.ge.s32.totalorder %s27, 1
      %s29 = scalar_select %p28, 0, %s27
      %s30 = sadd.s32 1, %s21
      %s31 = scalar_select %p28, %s30, %s21
      %p32 = scmp.ge.s32.totalorder %s31, 2
      %s33 = scalar_select %p32, 0, %s31
      %s34 = ssub.s32 %s21, %s33
      %s35 = ssub.s32 %s22, %s29
      %s36 = sor.u32 %s34, %s35
      %p37 = scmp.eq.s32.totalorder %s36, 0
      %s39 = sadd.s32 %s38, 1
      %s40 = scalar_select %p37, %s38, %s39
      %p43 = pneg %p37
      %p44 = scmp.eq.s32.totalorder %s14, 1
      %p45 = por %p43, %p44
      %p46 = scmp.ne.s32.totalorder %s38, %s41
      %p47 = scmp.eq.s32.totalorder %s14, 0
      %p48 = por %p46, %p47
      %p49 = scmp.ne.s32.totalorder %s38, %s41
      %p50 = scmp.eq.s32.totalorder %s19, 1
      %p51 = por %p49, %p50
      %p52 = scmp.ne.s32.totalorder %s41, %s42
      %p53 = scmp.eq.s32.totalorder %s19, 0
      %p54 = por %p52, %p53
      %p55 = scmp.ne.s32.totalorder %s41, %s42
      %p56 = scmp.eq.s32.totalorder %s20, 1
      %p57 = por %p55, %p56
      %p59 = scmp.ne.s32.totalorder %s42, %s58
      %p60 = scmp.eq.s32.totalorder %s20, 0
      %p61 = por %p59, %p60
      %s62 = ssub.s32 %s21, %s33
      %s63 = ssub.s32 %s22, %s29
      %s64 = sor.u32 %s62, %s63
      %p65 = scmp.eq.s32.totalorder %s64, 0
      %s67 = sadd.s32 %s66, 1
      %s68 = scalar_select %p65, %s66, %s67
      %p71 = pneg %p65
      %p72 = scmp.eq.s32.totalorder %s14, 1
      %p73 = por %p71, %p72
      %p74 = scmp.ne.s32.totalorder %s66, %s69
      %p75 = scmp.eq.s32.totalorder %s14, 0
      %p76 = por %p74, %p75
      %p77 = scmp.ne.s32.totalorder %s66, %s69
      %p78 = scmp.eq.s32.totalorder %s19, 1
      %p79 = por %p77, %p78
      %p80 = scmp.ne.s32.totalorder %s69, %s70
      %p81 = scmp.eq.s32.totalorder %s19, 0
      %p82 = por %p80, %p81
      %p83 = scmp.ne.s32.totalorder %s69, %s70
      %p84 = scmp.eq.s32.totalorder %s20, 1
      %p85 = por %p83, %p84
      %p87 = scmp.ne.s32.totalorder %s70, %s86
      %p88 = scmp.eq.s32.totalorder %s20, 0
      %p89 = por %p87, %p88
      %s90 = ssub.s32 %s21, %s33
      %s91 = ssub.s32 %s22, %s29
      %s92 = sor.u32 %s90, %s91
      %p93 = scmp.eq.s32.totalorder %s92, 0
      %s95 = sadd.s32 %s94, 1
      %s96 = scalar_select %p93, %s94, %s95
      %p99 = pneg %p93
      %p100 = scmp.eq.s32.totalorder %s14, 1
      %p101 = por %p99, %p100
      %p102 = scmp.ne.s32.totalorder %s94, %s97
      %p103 = scmp.eq.s32.totalorder %s14, 0
      %p104 = por %p102, %p103
      %p105 = scmp.ne.s32.totalorder %s94, %s97
      %p106 = scmp.eq.s32.totalorder %s19, 1
      %p107 = por %p105, %p106
      %p108 = scmp.ne.s32.totalorder %s97, %s98
      %p109 = scmp.eq.s32.totalorder %s19, 0
      %p110 = por %p108, %p109
      %p111 = scmp.ne.s32.totalorder %s97, %s98
      %p112 = scmp.eq.s32.totalorder %s20, 1
      %p113 = por %p111, %p112
      %p115 = scmp.ne.s32.totalorder %s98, %s114
      %p116 = scmp.eq.s32.totalorder %s20, 0
      %p117 = por %p115, %p116
      %s119 = sadd.s32 %s118, 1
      %p122 = scmp.eq.s32.totalorder %s14, 1
      %p123 = scmp.ne.s32.totalorder %s118, %s120
      %p124 = scmp.eq.s32.totalorder %s14, 0
      %p125 = por %p123, %p124
      %p126 = scmp.ne.s32.totalorder %s118, %s120
      %p127 = scmp.eq.s32.totalorder %s19, 1
      %p128 = por %p126, %p127
      %p129 = scmp.ne.s32.totalorder %s120, %s121
      %p130 = scmp.eq.s32.totalorder %s19, 0
      %p131 = por %p129, %p130
      %p132 = scmp.ne.s32.totalorder %s120, %s121
      %p133 = scmp.eq.s32.totalorder %s20, 1
      %p134 = por %p132, %p133
      %p136 = scmp.ne.s32.totalorder %s121, %s135
      %p137 = scmp.eq.s32.totalorder %s20, 0
      %p138 = por %p136, %p137
      %s140 = sadd.s32 %s139, 1
      %p143 = scmp.eq.s32.totalorder %s14, 1
      %p144 = scmp.ne.s32.totalorder %s139, %s141
      %p145 = scmp.eq.s32.totalorder %s14, 0
      %p146 = por %p144, %p145
      %p147 = scmp.ne.s32.totalorder %s139, %s141
      %p148 = scmp.eq.s32.totalorder %s19, 1
      %p149 = por %p147, %p148
      %p150 = scmp.ne.s32.totalorder %s141, %s142
      %p151 = scmp.eq.s32.totalorder %s19, 0
      %p152 = por %p150, %p151
      %p153 = scmp.ne.s32.totalorder %s141, %s142
      %p154 = scmp.eq.s32.totalorder %s20, 1
      %p155 = por %p153, %p154
      %p157 = scmp.ne.s32.totalorder %s142, %s156
      %p158 = scmp.eq.s32.totalorder %s20, 0
      %p159 = por %p157, %p158
      %s160 = ssub.s32 %s21, %s33
      %s161 = ssub.s32 %s22, %s29
      %s162 = sor.u32 %s160, %s161
      %p163 = scmp.eq.s32.totalorder %s162, 0
      %s165 = sadd.s32 %s164, 1
      %s166 = scalar_select %p163, %s164, %s165
      %p169 = pneg %p163
      %p170 = scmp.eq.s32.totalorder %s14, 1
      %p171 = por %p169, %p170
      %p172 = scmp.ne.s32.totalorder %s164, %s167
      %p173 = scmp.eq.s32.totalorder %s14, 0
      %p174 = por %p172, %p173
      %p175 = scmp.ne.s32.totalorder %s164, %s167
      %p176 = scmp.eq.s32.totalorder %s19, 1
      %p177 = por %p175, %p176
      %p178 = scmp.ne.s32.totalorder %s167, %s168
      %p179 = scmp.eq.s32.totalorder %s19, 0
      %p180 = por %p178, %p179
      %p181 = scmp.ne.s32.totalorder %s167, %s168
      %p182 = scmp.eq.s32.totalorder %s20, 1
      %p183 = por %p181, %p182
      %p185 = scmp.ne.s32.totalorder %s168, %s184
      %p186 = scmp.eq.s32.totalorder %s20, 0
      %p187 = por %p185, %p186
      %p188 = scmp.le.s32.totalorder 1, %s14
      %p189 = scmp.lt.s32.totalorder %s14, 3
      %p190 = pnand %p188, %p189
      %p191 = pneg %p190
      // Predicated region
      $region9: #{tpu_custom_call.1} parent=5 // pred_check
        _
      $region10: #{tpu_custom_call.1} parent=5 // pred_check_branch
        %193 = sbr.rel (%p190) target = $region12
      $region11: #{tpu_custom_call.1} parent=5 // pred_region
        %s194 = ssub.s32 %s14, 1
        // Predicated region
        $region13: #{tpu_custom_call.1} parent=11 // pred_check
          %p195 = pneg %p131
        $region14: #{tpu_custom_call.1} parent=11 // pred_check_branch
          %197 = sbr.rel (%p195) target = $region16
        $region15: #{tpu_custom_call.1} parent=11 // pred_region
          _
        $region16: #{tpu_custom_call.1} parent=11 // pred_fallthru
          _
        // Predicated region
        $region17: #{tpu_custom_call.1} parent=11 // pred_check
          %p198 = pneg %p152
        $region18: #{tpu_custom_call.1} parent=11 // pred_check_branch
          %200 = sbr.rel (%p198) target = $region20
        $region19: #{tpu_custom_call.1} parent=11 // pred_region
          _
        $region20: #{tpu_custom_call.1} parent=11 // pred_fallthru
          _
      $region12: #{tpu_custom_call.1} parent=5 // pred_fallthru
        _
      %p201 = scmp.lt.s32.totalorder %s14, 2
      // Predicated region
      $region21: #{tpu_custom_call.1} parent=5 // pred_check
        %p202 = pneg %p201
      $region22: #{tpu_custom_call.1} parent=5 // pred_check_branch
        %204 = sbr.rel (%p202) target = $region24
      $region23: #{tpu_custom_call.1} parent=5 // pred_region
        // Predicated region
        $region25: #{tpu_custom_call.1} parent=23 // pred_check
          %p205 = pneg %p48
        $region26: #{tpu_custom_call.1} parent=23 // pred_check_branch
          %207 = sbr.rel (%p205) target = $region28
        $region27: #{tpu_custom_call.1} parent=23 // pred_region
          %s208 = smul.u32 2, %s22
          %p209 = scmp.lt.s32.totalorder %s21, 1
          %s210 = scalar_select %p209, %s21, 1
          %p211 = scmp.lt.s32.totalorder %s208, 1
          %s212 = scalar_select %p211, %s208, 1
          %s213 = smul.addr %s210, 2
          %s214 = sadd.s32 %s212, %s213
          %s215 = smul.addr %s214, 8
          %s216 = scalar_lea.vmem %s0, %s215
          %s217 = smul.u32 2, %s22
        $region28: #{tpu_custom_call.1} parent=23 // pred_fallthru
          _
        // Predicated region
        $region29: #{tpu_custom_call.1} parent=23 // pred_check
          %p218 = pneg %p76
        $region30: #{tpu_custom_call.1} parent=23 // pred_check_branch
          %220 = sbr.rel (%p218) target = $region32
        $region31: #{tpu_custom_call.1} parent=23 // pred_region
          %s221 = smul.u32 2, %s22
          %p222 = scmp.lt.s32.totalorder %s21, 1
          %s223 = scalar_select %p222, %s21, 1
          %p224 = scmp.lt.s32.totalorder %s221, 1
          %s225 = scalar_select %p224, %s221, 1
          %s226 = smul.addr %s223, 2
          %s227 = sadd.s32 %s225, %s226
          %s228 = smul.addr %s227, 8
          %s229 = scalar_lea.vmem %s1, %s228
          %s230 = smul.u32 2, %s22
        $region32: #{tpu_custom_call.1} parent=23 // pred_fallthru
          _
        // Predicated region
        $region33: #{tpu_custom_call.1} parent=23 // pred_check
          %p231 = pneg %p104
        $region34: #{tpu_custom_call.1} parent=23 // pred_check_branch
          %233 = sbr.rel (%p231) target = $region36
        $region35: #{tpu_custom_call.1} parent=23 // pred_region
          %s234 = smul.u32 2, %s22
          %p235 = scmp.lt.s32.totalorder %s21, 1
          %s236 = scalar_select %p235, %s21, 1
          %p237 = scmp.lt.s32.totalorder %s234, 1
          %s238 = scalar_select %p237, %s234, 1
          %s239 = smul.addr %s236, 2
          %s240 = sadd.s32 %s238, %s239
          %s241 = smul.addr %s240, 8
          %s242 = scalar_lea.vmem %s2, %s241
          %s243 = smul.u32 2, %s22
        $region36: #{tpu_custom_call.1} parent=23 // pred_fallthru
          _
      $region24: #{tpu_custom_call.1} parent=5 // pred_fallthru
        _
      %p244 = scmp.le.s32.totalorder 1, %s14
      %p245 = scmp.lt.s32.totalorder %s14, 3
      %p246 = pnand %p244, %p245
      %p247 = pneg %p246
      // Predicated region
      $region37: #{tpu_custom_call.1} parent=5 // pred_check
        _
      $region38: #{tpu_custom_call.1} parent=5 // pred_check_branch
        %249 = sbr.rel (%p246) target = $region40
      $region39: #{tpu_custom_call.1} parent=5 // pred_region
        %s250 = ssub.s32 %s14, 1
        %s251 = smul.u32 2, %s24
        %p252 = scmp.lt.s32.totalorder %s23, 1
        %s253 = scalar_select %p252, %s23, 1
        %p254 = scmp.lt.s32.totalorder %s251, 1
        %s255 = scalar_select %p254, %s251, 1
        %s256 = smul.addr %s253, 2
        %s257 = sadd.s32 %s255, %s256
        %s258 = smul.addr %s257, 8
        %s259 = scalar_lea.vmem %s0, %s258
        %p260 = pneg %p54
        %p261 = pneg %p51
        %s262 = smul.u32 2, %s24
        %p263 = scmp.lt.s32.totalorder %s23, 1
        %s264 = scalar_select %p263, %s23, 1
        %p265 = scmp.lt.s32.totalorder %s262, 1
        %s266 = scalar_select %p265, %s262, 1
        %s267 = smul.addr %s264, 2
        %s268 = sadd.s32 %s266, %s267
        %s269 = smul.addr %s268, 8
        %s270 = scalar_lea.vmem %s1, %s269
        %p271 = pneg %p82
        %p272 = pneg %p79
        %s273 = smul.u32 2, %s24
        %p274 = scmp.lt.s32.totalorder %s23, 1
        %s275 = scalar_select %p274, %s23, 1
        %p276 = scmp.lt.s32.totalorder %s273, 1
        %s277 = scalar_select %p276, %s273, 1
        %s278 = smul.addr %s275, 2
        %s279 = sadd.s32 %s277, %s278
        %s280 = smul.addr %s279, 8
        %s281 = scalar_lea.vmem %s2, %s280
        %p282 = pneg %p110
        %p283 = pneg %p107
        %p284 = pneg %p131
        %p285 = pneg %p128
        %p286 = pneg %p152
        %p287 = pneg %p149
        %p288 = pneg %p180
        %p289 = pneg %p177
        %s290 = sand.u32 %s167, 1
        %s291 = scalar_lea.sflag [#allocation3], %s290
        %s292 = sand.u32 %s167, 1
        %s293 = smul.addr %s292, 16
        %s294 = scalar_lea.vmem [#allocation2], %s293
        %s295 = smul.u32 2, %s24
        %p296 = scmp.lt.s32.totalorder %s23, 1
        %s297 = scalar_select %p296, %s23, 1
        %p298 = scmp.lt.s32.totalorder %s295, 1
        %s299 = scalar_select %p298, %s295, 1
        %s300 = smul.addr %s297, 2
        %s301 = sadd.s32 %s299, %s300
        %s302 = smul.addr %s301, 8
        %s303 = scalar_lea.vmem %s0, %s302
        %s304 = smul.u32 2, %s24
        %s305 = smul.u32 2, %s24
        %p306 = scmp.lt.s32.totalorder %s23, 1
        %s307 = scalar_select %p306, %s23, 1
        %p308 = scmp.lt.s32.totalorder %s305, 1
        %s309 = scalar_select %p308, %s305, 1
        %s310 = smul.addr %s307, 2
        %s311 = sadd.s32 %s309, %s310
        %s312 = smul.addr %s311, 8
        %s313 = scalar_lea.vmem %s1, %s312
        %s314 = smul.u32 2, %s24
        %s315 = smul.u32 2, %s24
        %p316 = scmp.lt.s32.totalorder %s23, 1
        %s317 = scalar_select %p316, %s23, 1
        %p318 = scmp.lt.s32.totalorder %s315, 1
        %s319 = scalar_select %p318, %s315, 1
        %s320 = smul.addr %s317, 2
        %s321 = sadd.s32 %s319, %s320
        %s322 = smul.addr %s321, 8
        %s323 = scalar_lea.vmem %s2, %s322
        %s324 = smul.u32 2, %s24
        %s325 = smul.u32 2, %s24
        %v326 = vld [vmem:[%s303] sm:$0xff]
        %v327 = vld [vmem:[%s303 + $0x8] sm:$0xff]
        %v328 = vld [vmem:[%s3] sm:$0x7f]
        %v329 = vld [vmem:[%s313] sm:$0xff]
        %v330 = vld [vmem:[%s313 + $0x8] sm:$0xff]
        %s331 = scalar_lea.vmem %s3, 8
        %v332 = vld [vmem:[%s331] sm:$0x7f]
        %vm333 = vcmask 56320
        %v335 = vsel %vm333, %v329, 0
        %v338 = vsel %vm333, %v330, 0
        %vm340 = vcmask 1046528
        %v342 = vsel %vm340, %v332, 0
        %344 = vmatprep.subr.mxu0 0.0
        %345 = vmatpush1.msra.mxu0 %v342
        %346 = vmatprep.subr.mxu0 0.0
        %347 = vmatpush1.msra.mxu0 0.0
        %348 = vmatprep.subr.mxu0 0.0
        %349 = vmatpush1.msra.mxu0 0.0
        %350 = vmatprep.subr.mxu0 0.0
        %351 = vmatpush1.msra.mxu0 0.0
        %352 = vmatprep.subr.mxu0 0.0
        %353 = vmatpush1.msra.mxu0 0.0
        %354 = vmatprep.subr.mxu0 0.0
        %355 = vmatpush1.msra.mxu0 0.0
        %356 = vmatprep.subr.mxu0 0.0
        %357 = vmatpush1.msra.mxu0 0.0
        %358 = vmatprep.subr.mxu0 0.0
        %359 = vmatpush1.msra.mxu0 0.0
        %360 = vmatprep.subr.mxu0 0.0
        %361 = vmatpush1.msra.mxu0 0.0
        %362 = vmatprep.subr.mxu0 0.0
        %363 = vmatpush1.msra.mxu0 0.0
        %364 = vmatprep.subr.mxu0 0.0
        %365 = vmatpush1.msra.mxu0 0.0
        %366 = vmatprep.subr.mxu0 0.0
        %367 = vmatpush1.msra.mxu0 0.0
        %368 = vmatprep.subr.mxu0 0.0
        %369 = vmatpush1.msra.mxu0 0.0
        %370 = vmatprep.subr.mxu0 0.0
        %371 = vmatpush1.msra.mxu0 0.0
        %372 = vmatprep.subr.mxu0 0.0
        %373 = vmatpush1.msra.mxu0 0.0
        %374 = vmatprep.subr.mxu0 0.0
        %375 = vmatpush1.msra.mxu0 0.0
        %376 = vmatprep.subr.mxu0 0.0
        %377 = vmatpush1.msra.mxu0 0.0
        %378 = vmatprep.subr.mxu0 0.0
        %379 = vmatpush1.msra.mxu0 0.0
        %380 = vmatprep.subr.mxu0 0.0
        %381 = vmatpush1.msra.mxu0 0.0
        %382 = vmatprep.subr.mxu0 0.0
        %383 = vmatpush1.msra.mxu0 0.0
        %384 = vmatprep.subr.mxu0 0.0
        %385 = vmatpush1.msra.mxu0 0.0
        %386 = vmatprep.subr.mxu0 0.0
        %387 = vmatpush1.msra.mxu0 0.0
        %388 = vmatprep.subr.mxu0 0.0
        %389 = vmatpush1.msra.mxu0 0.0
        %390 = vmatprep.subr.mxu0 0.0
        %391 = vmatpush1.msra.mxu0 0.0
        %392 = vmatprep.subr.mxu0 0.0
        %393 = vmatpush1.msra.mxu0 0.0
        %394 = vmatprep.subr.mxu0 0.0
        %395 = vmatpush1.msra.mxu0 0.0
        %396 = vmatprep.subr.mxu0 0.0
        %397 = vmatpush1.msra.mxu0 0.0
        %398 = vmatprep.subr.mxu0 0.0
        %399 = vmatpush1.msra.mxu0 0.0
        %400 = vmatprep.subr.mxu0 0.0
        %401 = vmatpush1.msra.mxu0 0.0
        %402 = vmatprep.subr.mxu0 0.0
        %403 = vmatpush1.msra.mxu0 0.0
        %404 = vmatprep.subr.mxu0 0.0
        %405 = vmatpush1.msra.mxu0 0.0
        %406 = vmatprep.subr.mxu0 0.0
        %407 = vmatpush1.msra.mxu0 0.0
        %408 = vmatprep.mubr.f32.mxu0 0.0
        %409 = vmatmul.mubr.f32.gmra.mrb[0].mxu0 %v335
        %v410 = vpop.f32.mrb[0].mxu0
        %v411 = vadd.f32 0.0, %v410
        %v412 = vpop.f32.mrb[0].mxu0
        %413 = vmatprep.mubr.f32.mxu0 0.0
        %414 = vmatmul.mubr.f32.gmra.mrb[0].mxu0 %v338
        %v415 = vpop.f32.mrb[0].mxu0
        %v416 = vadd.f32 0.0, %v415
        %v417 = vpop.f32.mrb[0].mxu0
        %418 = vdwg.mxu0
        %v420 = vsel %vm333, %v326, 0
        %v423 = vsel %vm333, %v327, 0
        %v426 = vsel %vm340, %v328, 0
        %428 = vmatprep.subr.mxu0 0.0
        %429 = vmatpush1.msra.mxu0 %v426
        %430 = vmatprep.subr.mxu0 0.0
        %431 = vmatpush1.msra.mxu0 0.0
        %432 = vmatprep.subr.mxu0 0.0
        %433 = vmatpush1.msra.mxu0 0.0
        %434 = vmatprep.subr.mxu0 0.0
        %435 = vmatpush1.msra.mxu0 0.0
        %436 = vmatprep.subr.mxu0 0.0
        %437 = vmatpush1.msra.mxu0 0.0
        %438 = vmatprep.subr.mxu0 0.0
        %439 = vmatpush1.msra.mxu0 0.0
        %440 = vmatprep.subr.mxu0 0.0
        %441 = vmatpush1.msra.mxu0 0.0
        %442 = vmatprep.subr.mxu0 0.0
        %443 = vmatpush1.msra.mxu0 0.0
        %444 = vmatprep.subr.mxu0 0.0
        %445 = vmatpush1.msra.mxu0 0.0
        %446 = vmatprep.subr.mxu0 0.0
        %447 = vmatpush1.msra.mxu0 0.0
        %448 = vmatprep.subr.mxu0 0.0
        %449 = vmatpush1.msra.mxu0 0.0
        %450 = vmatprep.subr.mxu0 0.0
        %451 = vmatpush1.msra.mxu0 0.0
        %452 = vmatprep.subr.mxu0 0.0
        %453 = vmatpush1.msra.mxu0 0.0
        %454 = vmatprep.subr.mxu0 0.0
        %455 = vmatpush1.msra.mxu0 0.0
        %456 = vmatprep.subr.mxu0 0.0
        %457 = vmatpush1.msra.mxu0 0.0
        %458 = vmatprep.subr.mxu0 0.0
        %459 = vmatpush1.msra.mxu0 0.0
        %460 = vmatprep.subr.mxu0 0.0
        %461 = vmatpush1.msra.mxu0 0.0
        %462 = vmatprep.subr.mxu0 0.0
        %463 = vmatpush1.msra.mxu0 0.0
        %464 = vmatprep.subr.mxu0 0.0
        %465 = vmatpush1.msra.mxu0 0.0
        %466 = vmatprep.subr.mxu0 0.0
        %467 = vmatpush1.msra.mxu0 0.0
        %468 = vmatprep.subr.mxu0 0.0
        %469 = vmatpush1.msra.mxu0 0.0
        %470 = vmatprep.subr.mxu0 0.0
        %471 = vmatpush1.msra.mxu0 0.0
        %472 = vmatprep.subr.mxu0 0.0
        %473 = vmatpush1.msra.mxu0 0.0
        %474 = vmatprep.subr.mxu0 0.0
        %475 = vmatpush1.msra.mxu0 0.0
        %476 = vmatprep.subr.mxu0 0.0
        %477 = vmatpush1.msra.mxu0 0.0
        %478 = vmatprep.subr.mxu0 0.0
        %479 = vmatpush1.msra.mxu0 0.0
        %480 = vmatprep.subr.mxu0 0.0
        %481 = vmatpush1.msra.mxu0 0.0
        %482 = vmatprep.subr.mxu0 0.0
        %483 = vmatpush1.msra.mxu0 0.0
        %484 = vmatprep.subr.mxu0 0.0
        %485 = vmatpush1.msra.mxu0 0.0
        %486 = vmatprep.subr.mxu0 0.0
        %487 = vmatpush1.msra.mxu0 0.0
        %488 = vmatprep.subr.mxu0 0.0
        %489 = vmatpush1.msra.mxu0 0.0
        %490 = vmatprep.subr.mxu0 0.0
        %491 = vmatpush1.msra.mxu0 0.0
        %492 = vmatprep.mubr.f32.mxu0 0.0
        %493 = vmatmul.mubr.f32.gmra.mrb[0].mxu0 %v420
        %v494 = vpop.f32.mrb[0].mxu0
        %v495 = vadd.f32 %v411, %v494
        %v496 = vpop.f32.mrb[0].mxu0
        %497 = vmatprep.mubr.f32.mxu0 0.0
        %498 = vmatmul.mubr.f32.gmra.mrb[0].mxu0 %v423
        %v499 = vpop.f32.mrb[0].mxu0
        %v500 = vadd.f32 %v416, %v499
        %v501 = vpop.f32.mrb[0].mxu0
        %502 = vdwg.mxu0
        %v503 = vld [vmem:[%s323] sm:$0xff]
        %v504 = vld [vmem:[%s323 + $0x8] sm:$0xff]
        %s505 = scalar_lea.vmem %s3, 16
        %v506 = vld [vmem:[%s505] sm:$0x7f]
        %v508 = vsel %vm333, %v503, 0
        %v511 = vsel %vm333, %v504, 0
        %v514 = vsel %vm340, %v506, 0
        %516 = vmatprep.subr.mxu0 0.0
        %517 = vmatpush1.msra.mxu0 %v514
        %518 = vmatprep.subr.mxu0 0.0
        %519 = vmatpush1.msra.mxu0 0.0
        %520 = vmatprep.subr.mxu0 0.0
        %521 = vmatpush1.msra.mxu0 0.0
        %522 = vmatprep.subr.mxu0 0.0
        %523 = vmatpush1.msra.mxu0 0.0
        %524 = vmatprep.subr.mxu0 0.0
        %525 = vmatpush1.msra.mxu0 0.0
        %526 = vmatprep.subr.mxu0 0.0
        %527 = vmatpush1.msra.mxu0 0.0
        %528 = vmatprep.subr.mxu0 0.0
        %529 = vmatpush1.msra.mxu0 0.0
        %530 = vmatprep.subr.mxu0 0.0
        %531 = vmatpush1.msra.mxu0 0.0
        %532 = vmatprep.subr.mxu0 0.0
        %533 = vmatpush1.msra.mxu0 0.0
        %534 = vmatprep.subr.mxu0 0.0
        %535 = vmatpush1.msra.mxu0 0.0
        %536 = vmatprep.subr.mxu0 0.0
        %537 = vmatpush1.msra.mxu0 0.0
        %538 = vmatprep.subr.mxu0 0.0
        %539 = vmatpush1.msra.mxu0 0.0
        %540 = vmatprep.subr.mxu0 0.0
        %541 = vmatpush1.msra.mxu0 0.0
        %542 = vmatprep.subr.mxu0 0.0
        %543 = vmatpush1.msra.mxu0 0.0
        %544 = vmatprep.subr.mxu0 0.0
        %545 = vmatpush1.msra.mxu0 0.0
        %546 = vmatprep.subr.mxu0 0.0
        %547 = vmatpush1.msra.mxu0 0.0
        %548 = vmatprep.subr.mxu0 0.0
        %549 = vmatpush1.msra.mxu0 0.0
        %550 = vmatprep.subr.mxu0 0.0
        %551 = vmatpush1.msra.mxu0 0.0
        %552 = vmatprep.subr.mxu0 0.0
        %553 = vmatpush1.msra.mxu0 0.0
        %554 = vmatprep.subr.mxu0 0.0
        %555 = vmatpush1.msra.mxu0 0.0
        %556 = vmatprep.subr.mxu0 0.0
        %557 = vmatpush1.msra.mxu0 0.0
        %558 = vmatprep.subr.mxu0 0.0
        %559 = vmatpush1.msra.mxu0 0.0
        %560 = vmatprep.subr.mxu0 0.0
        %561 = vmatpush1.msra.mxu0 0.0
        %562 = vmatprep.subr.mxu0 0.0
        %563 = vmatpush1.msra.mxu0 0.0
        %564 = vmatprep.subr.mxu0 0.0
        %565 = vmatpush1.msra.mxu0 0.0
        %566 = vmatprep.subr.mxu0 0.0
        %567 = vmatpush1.msra.mxu0 0.0
        %568 = vmatprep.subr.mxu0 0.0
        %569 = vmatpush1.msra.mxu0 0.0
        %570 = vmatprep.subr.mxu0 0.0
        %571 = vmatpush1.msra.mxu0 0.0
        %572 = vmatprep.subr.mxu0 0.0
        %573 = vmatpush1.msra.mxu0 0.0
        %574 = vmatprep.subr.mxu0 0.0
        %575 = vmatpush1.msra.mxu0 0.0
        %576 = vmatprep.subr.mxu0 0.0
        %577 = vmatpush1.msra.mxu0 0.0
        %578 = vmatprep.subr.mxu0 0.0
        %579 = vmatpush1.msra.mxu0 0.0
        %580 = vmatprep.mubr.f32.mxu0 0.0
        %581 = vmatmul.mubr.f32.gmra.mrb[0].mxu0 %v508
        %v582 = vpop.f32.mrb[0].mxu0
        %v583 = vadd.f32 0.0, %v582
        %v584 = vpop.f32.mrb[0].mxu0
        %585 = vmatprep.mubr.f32.mxu0 0.0
        %586 = vmatmul.mubr.f32.gmra.mrb[0].mxu0 %v511
        %v587 = vpop.f32.mrb[0].mxu0
        %v588 = vadd.f32 0.0, %v587
        %v589 = vpop.f32.mrb[0].mxu0
        %590 = vdwg.mxu0
        %v591 = vadd.f32 %v495, %v583
        %v592 = vadd.f32 %v500, %v588
        %v593 = vld [vmem:[%s4] sm:$0x1]
        %v595 = vlaneseq
        %v596 = vshrl.u32 %v595, 7
        %v597 = vsub.s32 0, %v596
        %v598 = vrot.slane %v593, %v597
        %v600 = vadd.f32 %v591, %v598
        %v601 = vadd.f32 %v592, %v598
        %602 = vst [vmem:[%s294] sm:$0xff] %v600
        %603 = vst [vmem:[%s294 + $0x8] sm:$0xff] %v601
        %s604 = sand.u32 %s167, 1
        %s605 = scalar_lea.sflag [#allocation3], %s604
        %s606 = sand.u32 %s167, 1
        %s607 = smul.addr %s606, 16
        %s608 = scalar_lea.vmem [#allocation2], %s607
        // Predicated region
        $region41: #{tpu_custom_call.1} parent=39 // pred_check
          %p609 = pneg %p177
        $region42: #{tpu_custom_call.1} parent=39 // pred_check_branch
          %611 = sbr.rel (%p609) target = $region44
        $region43: #{tpu_custom_call.1} parent=39 // pred_region
          %s612 = smul.u32 2, %s24
          %s614 = ssub.s32 256, 256
          %615 = vsyncadd %s605, %s614
          %s616 = smul.addr %s23, 2
          %s617 = sadd.s32 %s612, %s616
          %s618 = smul.addr %s617, 128
          %s619 = scalar_lea.hbm %s5, %s618
          %s620 = sshll.u32 %s608, 4
          %s621 = int_to_ptr.vmem [resolvable:$true] %s620
          %626 = dma.vmem_to_hbm [thread:$0]  %s621, 256, %s619, %s605, 128, 128, 8
        $region44: #{tpu_custom_call.1} parent=39 // pred_fallthru
          _
      $region40: #{tpu_custom_call.1} parent=5 // pred_fallthru
        _
      %p627 = scmp.le.s32.totalorder 2, %s14
      // Predicated region
      $region45: #{tpu_custom_call.1} parent=5 // pred_check
        %p628 = pneg %p627
      $region46: #{tpu_custom_call.1} parent=5 // pred_check_branch
        %630 = sbr.rel (%p628) target = $region48
      $region47: #{tpu_custom_call.1} parent=5 // pred_region
        %s631 = ssub.s32 %s14, 2
        // Predicated region
        $region49: #{tpu_custom_call.1} parent=47 // pred_check
          %p632 = pneg %p183
        $region50: #{tpu_custom_call.1} parent=47 // pred_check_branch
          %634 = sbr.rel (%p632) target = $region52
        $region51: #{tpu_custom_call.1} parent=47 // pred_region
          %s635 = sand.u32 %s168, 1
          %s636 = scalar_lea.sflag [#allocation3], %s635
          %s637 = sand.u32 %s168, 1
          %s638 = smul.addr %s637, 16
          %s639 = scalar_lea.vmem [#allocation2], %s638
          %640 = dma.done %s636, 256
        $region52: #{tpu_custom_call.1} parent=47 // pred_fallthru
          _
      $region48: #{tpu_custom_call.1} parent=5 // pred_fallthru
        _
    $region6: #{tpu_custom_call.1} parent=1 // loop_footer
      %s18 = sadd.s32 1, %s14
    $region7: #{tpu_custom_call.1} parent=1 // loop_footer_branch
      %13 = sbr.rel target = $region3
    $region8: #{tpu_custom_call.1} parent=1 // loop_exit
      _
    %641 = vsyncpa [#allocation3], 1
    %s642 = scalar_lea.sflag [#allocation3], 1
    %643 = vsyncpa %s642, 1

</llo_original>
